<compile_context>
chip_gen: v7x
topology: tpu7x:2x2x1
jax: 0.10.0
libtpu: 0.0.40
codegen_flags: <defaults>
</compile_context>

<pallas_src>
import jax
import jax.numpy as jnp
from jax.experimental import pallas as pl
from jax.experimental.pallas import tpu as pltpu

H1, H2, H3 = 256, 128, 64
H3P = 128          # H3 zero-padded to a full lane width
_NEG = -1e30       # effectively -inf for padded class logits


def _round_up(a, b):
    return (a + b - 1) // b * b


def mlp_softmax_kernel(x_ref, w1_ref, w2_ref, w3_ref, w4_ref, b_ref, out_ref):
    # x tile: (TB, input_size) f32; weights bf16; b_ref: (4, bw) f32 packed.
    c_pad = out_ref.shape[1]
    h3p = w3_ref.shape[1]
    x = x_ref[...].astype(jnp.bfloat16)

    b1 = b_ref[0:1, :H1]
    b2 = b_ref[1:2, :H2]
    b3 = b_ref[2:3, :h3p]
    b4 = b_ref[3:4, :c_pad]

    # Linear(input_size, 256) + ReLU   (Dropout = identity in eval mode)
    h1 = jnp.dot(x, w1_ref[...], preferred_element_type=jnp.float32) + b1
    h1 = jnp.maximum(h1, 0.0)

    # Linear(256, 128) + ReLU
    h2 = jnp.dot(h1.astype(jnp.bfloat16), w2_ref[...],
                 preferred_element_type=jnp.float32) + b2
    h2 = jnp.maximum(h2, 0.0)

    # Linear(128, 64->128 padded) + ReLU  (padded lanes stay exactly 0)
    h3 = jnp.dot(h2.astype(jnp.bfloat16), w3_ref[...],
                 preferred_element_type=jnp.float32) + b3
    h3 = jnp.maximum(h3, 0.0)

    # Linear(64, num_classes) (class axis padded to c_pad; pad bias = -1e30)
    logits = jnp.dot(h3.astype(jnp.bfloat16), w4_ref[...],
                     preferred_element_type=jnp.float32) + b4

    # Numerically stable softmax over the class axis (f32, exact normalize).
    m = jnp.max(logits, axis=1, keepdims=True)
    e = jnp.exp(logits - m)
    s = jnp.sum(e, axis=1, keepdims=True)
    out_ref[...] = (e / s).astype(out_ref.dtype)


def prepare_params(params, num_classes):
    """One-time packing/casting of (in,out)-layout f32 params for the kernel."""
    c_pad = _round_up(max(num_classes, 1), 128)
    bw = max(H1, c_pad)  # packed-bias lane width

    def as_row(b):
        return jnp.reshape(b, (1, -1)).astype(jnp.float32)

    b1, b2, b3, b4 = (as_row(params[k]) for k in ("b1", "b2", "b3", "b4"))
    # H3 padding: b3 zero-padded to H3P, padded lanes carry zeros.
    b3p = jnp.pad(b3, ((0, 0), (0, H3P - H3)))
    # Class padding: -1e30 bias so exp underflows to exactly 0.
    b4p = jnp.full((1, c_pad), _NEG, jnp.float32).at[:, :num_classes].set(b4)

    def padw(row, width):
        return jnp.pad(row, ((0, 0), (0, width - row.shape[1])))

    b_packed = jnp.concatenate(
        [padw(b1, bw), padw(b2, bw), padw(b3p, bw), padw(b4p, bw)], axis=0)

    # w3: pad cols 64 -> 128 (zeros). w4: pad rows 64 -> 128 and cols -> c_pad.
    w3p = jnp.pad(params["w3"].astype(jnp.float32), ((0, 0), (0, H3P - H3)))
    w4p = jnp.pad(params["w4"].astype(jnp.float32),
                  ((0, H3P - H3), (0, c_pad - num_classes)))

    return {
        "w1": params["w1"].astype(jnp.bfloat16),
        "w2": params["w2"].astype(jnp.bfloat16),
        "w3": w3p.astype(jnp.bfloat16),
        "w4": w4p.astype(jnp.bfloat16),
        "b_packed": b_packed,
        "num_classes": num_classes,
        "c_pad": c_pad,
    }


def _pick_tile(batch):
    """MXU/(8,128)-legal batch tile; >=2 grid steps whenever batch > 8."""
    if batch >= 2048:
        return 1024
    if batch >= 1024:
        return 512
    # Split in two so both v7x TensorCores get work (falls back to 8 minimum).
    return max(8, _round_up((batch + 1) // 2, 8))


def simple_classification_network(x, prepared, tb=None,
                                  out_dtype=jnp.bfloat16,
                                  return_padded=False):
    """x: (batch, input_size) f32. prepared: output of prepare_params."""
    batch, input_size = x.shape
    num_classes = prepared["num_classes"]
    c_pad = prepared["c_pad"]

    if tb is None:
        tb = _pick_tile(batch)
    tb = _round_up(tb, 8)
    batch_p = _round_up(batch, tb)
    if batch_p != batch:
        x = jnp.pad(x, ((0, batch_p - batch), (0, 0)))

    w1, w2, w3, w4 = (prepared[k] for k in ("w1", "w2", "w3", "w4"))
    bpk = prepared["b_packed"]

    out_bytes = jnp.dtype(out_dtype).itemsize
    flops = 2 * batch_p * (input_size * H1 + H1 * H2 + H2 * H3P + H3P * c_pad)
    bytes_accessed = (x.size * 4
                      + 2 * (w1.size + w2.size + w3.size + w4.size)
                      + bpk.size * 4
                      + batch_p * c_pad * out_bytes)
    cost = pl.CostEstimate(flops=flops,
                           transcendentals=batch_p * c_pad,
                           bytes_accessed=bytes_accessed)

    # Explicit VMEM budget (double-buffered x/out tiles + resident weights +
    # live intermediates), with margin; capped well under v7x's 64 MiB.
    est_vmem = (2 * tb * input_size * 4
                + 2 * tb * c_pad * out_bytes
                + 2 * (w1.size + w2.size + w3.size + w4.size)
                + bpk.size * 4
                + tb * (H1 + H2 + H3P + c_pad) * 4)
    vmem_limit = int(min(max(4 * est_vmem, 8 << 20), 56 << 20))

    resident = lambda i: (0, 0)  # weights/biases stay in VMEM across the grid

    out = pl.pallas_call(
        mlp_softmax_kernel,
        out_shape=jax.ShapeDtypeStruct((batch_p, c_pad), out_dtype),
        grid=(batch_p // tb,),
        in_specs=[
            pl.BlockSpec((tb, input_size), lambda i: (i, 0)),
            pl.BlockSpec(w1.shape, resident),
            pl.BlockSpec(w2.shape, resident),
            pl.BlockSpec(w3.shape, resident),
            pl.BlockSpec(w4.shape, resident),
            pl.BlockSpec(bpk.shape, resident),
        ],
        out_specs=pl.BlockSpec((tb, c_pad), lambda i: (i, 0)),
        compiler_params=pltpu.CompilerParams(
            dimension_semantics=("parallel",),
            vmem_limit_bytes=vmem_limit),
        cost_estimate=cost,
    )(x, w1, w2, w3, w4, bpk)

    if return_padded:
        # Padded class probs are exactly 0; padded rows are garbage but
        # correspond to padded batch entries only. Skips an extra HBM pass.
        return out
    return out[:batch, :num_classes]


def init_params(key, input_size, num_classes):
    """Deterministic synthetic parameters (shapes match the PyTorch module)."""
    dims = [(input_size, H1), (H1, H2), (H2, H3), (H3, num_classes)]
    params = {}
    for i, (din, dout) in enumerate(dims, start=1):
        key, kw, kb = jax.random.split(key, 3)
        scale = 1.0 / jnp.sqrt(jnp.float32(din))
        params[f"w{i}"] = jax.random.uniform(kw, (din, dout), jnp.float32,
                                             minval=-scale, maxval=scale)
        params[f"b{i}"] = jax.random.uniform(kb, (1, dout), jnp.float32,
                                             minval=-scale, maxval=scale)
    return params


def reference_forward(x, params):
    h = jnp.maximum(x @ params["w1"] + params["b1"], 0.0)
    h = jnp.maximum(h @ params["w2"] + params["b2"], 0.0)
    h = jnp.maximum(h @ params["w3"] + params["b3"], 0.0)
    logits = h @ params["w4"] + params["b4"]
    return jax.nn.softmax(logits, axis=1)


if __name__ == "__main__":
    batch, input_size, num_classes = 16, 32, 10

    key = jax.random.PRNGKey(0)
    key, kx = jax.random.split(key)
    x = jax.random.normal(kx, (batch, input_size), jnp.float32)
    params = init_params(key, input_size, num_classes)
    prepared = prepare_params(params, num_classes)

    # Default tile policy -> tb=8, 2 grid steps: exercises batch tiling,
    # VMEM-resident weights, and the >=2-step (v7x megacore) policy.
    out = simple_classification_network(x, prepared)
    out = jax.block_until_ready(out)

    ref = reference_forward(x, params)
    assert out.shape == (batch, num_classes)
    out_f32 = out.astype(jnp.float32)
    # bf16 MXU inputs + bf16 output store -> tolerances sized accordingly.
    assert jnp.allclose(out_f32, ref, atol=1e-2, rtol=5e-2)
    assert jnp.allclose(jnp.sum(out_f32, axis=1), 1.0, atol=1e-2)

    print("KERNEL_OK")
</pallas_src>

<mosaic_0001>
module attributes {stable_mosaic.version = 11 : i64} {
  func.func @mlp_softmax_kernel(%arg0: i32, %arg1: memref<8x32xf32, #tpu.memory_space<vmem>>, %arg2: memref<32x256xbf16, #tpu.memory_space<vmem>>, %arg3: memref<256x128xbf16, #tpu.memory_space<vmem>>, %arg4: memref<128x128xbf16, #tpu.memory_space<vmem>>, %arg5: memref<128x128xbf16, #tpu.memory_space<vmem>>, %arg6: memref<4x256xf32, #tpu.memory_space<vmem>>, %arg7: memref<8x128xbf16, #tpu.memory_space<vmem>>) attributes {dimension_semantics = [#tpu.dimension_semantics<parallel>], iteration_bounds = array<i64: 2>, scalar_prefetch = 0 : i64, scratch_operands = 0 : i64, tpu.core_type = #tpu.core_type<tc>, window_params = [{transform_indices = @transform_0, window_bounds = array<i64: 8, 32>}, {pipeline_mode = #tpu.pipeline_mode<synchronous>, transform_indices = @transform_1, window_bounds = array<i64: 32, 256>}, {pipeline_mode = #tpu.pipeline_mode<synchronous>, transform_indices = @transform_2, window_bounds = array<i64: 256, 128>}, {pipeline_mode = #tpu.pipeline_mode<synchronous>, transform_indices = @transform_3, window_bounds = array<i64: 128, 128>}, {pipeline_mode = #tpu.pipeline_mode<synchronous>, transform_indices = @transform_4, window_bounds = array<i64: 128, 128>}, {pipeline_mode = #tpu.pipeline_mode<synchronous>, transform_indices = @transform_5, window_bounds = array<i64: 4, 256>}, {transform_indices = @transform_6, window_bounds = array<i64: 8, 128>}]} {
    %c0 = arith.constant 0 : index
    %c0_0 = arith.constant 0 : index
    %0 = vector.load %arg1[%c0, %c0_0] : memref<8x32xf32, #tpu.memory_space<vmem>>, vector<8x32xf32>
    %1 = arith.truncf %0 : vector<8x32xf32> to vector<8x32xbf16>
    %c0_1 = arith.constant 0 : index
    %c0_2 = arith.constant 0 : index
    %2 = vector.load %arg6[%c0_1, %c0_2] : memref<4x256xf32, #tpu.memory_space<vmem>>, vector<1x256xf32>
    %c1 = arith.constant 1 : index
    %c0_3 = arith.constant 0 : index
    %3 = vector.load %arg6[%c1, %c0_3] : memref<4x256xf32, #tpu.memory_space<vmem>>, vector<1x128xf32>
    %c2 = arith.constant 2 : index
    %c0_4 = arith.constant 0 : index
    %4 = vector.load %arg6[%c2, %c0_4] : memref<4x256xf32, #tpu.memory_space<vmem>>, vector<1x128xf32>
    %c3 = arith.constant 3 : index
    %c0_5 = arith.constant 0 : index
    %5 = vector.load %arg6[%c3, %c0_5] : memref<4x256xf32, #tpu.memory_space<vmem>>, vector<1x128xf32>
    %c0_6 = arith.constant 0 : index
    %c0_7 = arith.constant 0 : index
    %6 = vector.load %arg2[%c0_6, %c0_7] : memref<32x256xbf16, #tpu.memory_space<vmem>>, vector<32x256xbf16>
    %cst = arith.constant dense<0.000000e+00> : vector<8x256xf32>
    %7 = tpu.matmul %1, %6, %cst {dimension_numbers = #tpu.dot_dimension_numbers<[1], [0], [0], [1], [0, 0, 1, 1], [], []>} : vector<8x32xbf16>, vector<32x256xbf16>, vector<8x256xf32> -> vector<8x256xf32>
    %8 = vector.broadcast %2 : vector<1x256xf32> to vector<8x256xf32>
    %9 = arith.addf %7, %8 : vector<8x256xf32>
    %cst_8 = arith.constant 0.000000e+00 : f32
    %10 = vector.broadcast %cst_8 : f32 to vector<8x256xf32>
    %11 = arith.maximumf %9, %10 : vector<8x256xf32>
    %12 = arith.truncf %11 : vector<8x256xf32> to vector<8x256xbf16>
    %c0_9 = arith.constant 0 : index
    %c0_10 = arith.constant 0 : index
    %13 = vector.load %arg3[%c0_9, %c0_10] : memref<256x128xbf16, #tpu.memory_space<vmem>>, vector<256x128xbf16>
    %cst_11 = arith.constant dense<0.000000e+00> : vector<8x128xf32>
    %14 = tpu.matmul %12, %13, %cst_11 {dimension_numbers = #tpu.dot_dimension_numbers<[1], [0], [0], [1], [0, 0, 1, 1], [], []>} : vector<8x256xbf16>, vector<256x128xbf16>, vector<8x128xf32> -> vector<8x128xf32>
    %15 = vector.broadcast %3 : vector<1x128xf32> to vector<8x128xf32>
    %16 = arith.addf %14, %15 : vector<8x128xf32>
    %cst_12 = arith.constant 0.000000e+00 : f32
    %17 = vector.broadcast %cst_12 : f32 to vector<8x128xf32>
    %18 = arith.maximumf %16, %17 : vector<8x128xf32>
    %19 = arith.truncf %18 : vector<8x128xf32> to vector<8x128xbf16>
    %c0_13 = arith.constant 0 : index
    %c0_14 = arith.constant 0 : index
    %20 = vector.load %arg4[%c0_13, %c0_14] : memref<128x128xbf16, #tpu.memory_space<vmem>>, vector<128x128xbf16>
    %cst_15 = arith.constant dense<0.000000e+00> : vector<8x128xf32>
    %21 = tpu.matmul %19, %20, %cst_15 {dimension_numbers = #tpu.dot_dimension_numbers<[1], [0], [0], [1], [0, 0, 1, 1], [], []>} : vector<8x128xbf16>, vector<128x128xbf16>, vector<8x128xf32> -> vector<8x128xf32>
    %22 = vector.broadcast %4 : vector<1x128xf32> to vector<8x128xf32>
    %23 = arith.addf %21, %22 : vector<8x128xf32>
    %cst_16 = arith.constant 0.000000e+00 : f32
    %24 = vector.broadcast %cst_16 : f32 to vector<8x128xf32>
    %25 = arith.maximumf %23, %24 : vector<8x128xf32>
    %26 = arith.truncf %25 : vector<8x128xf32> to vector<8x128xbf16>
    %c0_17 = arith.constant 0 : index
    %c0_18 = arith.constant 0 : index
    %27 = vector.load %arg5[%c0_17, %c0_18] : memref<128x128xbf16, #tpu.memory_space<vmem>>, vector<128x128xbf16>
    %cst_19 = arith.constant dense<0.000000e+00> : vector<8x128xf32>
    %28 = tpu.matmul %26, %27, %cst_19 {dimension_numbers = #tpu.dot_dimension_numbers<[1], [0], [0], [1], [0, 0, 1, 1], [], []>} : vector<8x128xbf16>, vector<128x128xbf16>, vector<8x128xf32> -> vector<8x128xf32>
    %29 = vector.broadcast %5 : vector<1x128xf32> to vector<8x128xf32>
    %30 = arith.addf %28, %29 : vector<8x128xf32>
    %cst_20 = arith.constant dense<0xFF800000> : vector<8xf32>
    %31 = vector.multi_reduction <maximumf>, %30, %cst_20 [1] : vector<8x128xf32> to vector<8xf32>
    %32 = vector.shape_cast %31 : vector<8xf32> to vector<8x1xf32>
    %33 = vector.broadcast %32 : vector<8x1xf32> to vector<8x128xf32>
    %34 = arith.subf %30, %33 : vector<8x128xf32>
    %35 = math.exp %34 : vector<8x128xf32>
    %cst_21 = arith.constant dense<0.000000e+00> : vector<8xf32>
    %36 = vector.multi_reduction <add>, %35, %cst_21 [1] : vector<8x128xf32> to vector<8xf32>
    %37 = vector.shape_cast %36 : vector<8xf32> to vector<8x1xf32>
    %38 = vector.broadcast %37 : vector<8x1xf32> to vector<8x128xf32>
    %39 = arith.divf %35, %38 : vector<8x128xf32>
    %40 = arith.truncf %39 : vector<8x128xf32> to vector<8x128xbf16>
    %c0_22 = arith.constant 0 : index
    %c0_23 = arith.constant 0 : index
    %41 = vector.load %arg7[%c0_22, %c0_23] : memref<8x128xbf16, #tpu.memory_space<vmem>>, vector<8x128xbf16>
    tpu.vector_store %arg7[%c0_22, %c0_23], %40 {strides = array<i32>} : memref<8x128xbf16, #tpu.memory_space<vmem>>, vector<8x128xbf16>,
    return
  }
  func.func @transform_0(%arg0: i32) -> (i32, i32) {
    %c0_i32 = arith.constant 0 : i32
    %c0_i32_0 = arith.constant 0 : i32
    return %arg0, %c0_i32 : i32, i32
  }
  func.func @transform_1(%arg0: i32) -> (i32, i32) {
    %c0_i32 = arith.constant 0 : i32
    %c0_i32_0 = arith.constant 0 : i32
    %c0_i32_1 = arith.constant 0 : i32
    return %c0_i32, %c0_i32_0 : i32, i32
  }
  func.func @transform_2(%arg0: i32) -> (i32, i32) {
    %c0_i32 = arith.constant 0 : i32
    %c0_i32_0 = arith.constant 0 : i32
    %c0_i32_1 = arith.constant 0 : i32
    return %c0_i32, %c0_i32_0 : i32, i32
  }
  func.func @transform_3(%arg0: i32) -> (i32, i32) {
    %c0_i32 = arith.constant 0 : i32
    %c0_i32_0 = arith.constant 0 : i32
    %c0_i32_1 = arith.constant 0 : i32
    return %c0_i32, %c0_i32_0 : i32, i32
  }
  func.func @transform_4(%arg0: i32) -> (i32, i32) {
    %c0_i32 = arith.constant 0 : i32
    %c0_i32_0 = arith.constant 0 : i32
    %c0_i32_1 = arith.constant 0 : i32
    return %c0_i32, %c0_i32_0 : i32, i32
  }
  func.func @transform_5(%arg0: i32) -> (i32, i32) {
    %c0_i32 = arith.constant 0 : i32
    %c0_i32_0 = arith.constant 0 : i32
    %c0_i32_1 = arith.constant 0 : i32
    return %c0_i32, %c0_i32_0 : i32, i32
  }
  func.func @transform_6(%arg0: i32) -> (i32, i32) {
    %c0_i32 = arith.constant 0 : i32
    %c0_i32_0 = arith.constant 0 : i32
    return %arg0, %c0_i32 : i32, i32
  }
}

</mosaic_0001>

<llo_original>
// kernel: tpu_custom_call.1
$region0: #{tpu_custom_call.1}
  #allocation0 [shape = 'u32[]', space=smem, size = 0x4, offset = 0x4, fixed_abs, tag = 'smem constant byte address 0x4 - core index']
  #allocation1 [shape = 'u32[144,128]{1,0:T(1,128)}', space=vmem, size = 0x12000, scoped, tag = 'internal scratch']
  %s0 = inlined_call_operand.hbm [shape: f32[16,32], index: 0, kind: input, shape index: {}]
  %s1 = inlined_call_operand.hbm [shape: bf16[32,256], index: 1, kind: input, shape index: {}]
  %s2 = inlined_call_operand.hbm [shape: bf16[256,128], index: 2, kind: input, shape index: {}]
  %s3 = inlined_call_operand.hbm [shape: bf16[128,128], index: 3, kind: input, shape index: {}]
  %s4 = inlined_call_operand.hbm [shape: bf16[128,128], index: 4, kind: input, shape index: {}]
  %s5 = inlined_call_operand.vmem [shape: f32[4,256], index: 5, kind: input, shape index: {}]
  %s6 = inlined_call_operand.hbm [shape: bf16[16,128], index: 6, kind: output, shape index: {}]
  %s7 = sld [smem:[#allocation0]]
  $region77: #{tpu_custom_call.1} parent=0
    _
  %s9 = ssub.s32 1, %s7
  %s10 = scalar_select 0, %s9, %s7
  $region1: #{tpu_custom_call.1} parent=0
    #allocation2 [shape = 'u8[8192]{0}', space=vmem, size = 0x2000, scoped, tag = 'input window, operand 0']
    #allocation3 [shape = 's32[2]{0}', space=sflag, size = 0x8, scoped, tag = 'scoped memory for tpu_custom_call.1']
    #allocation4 [shape = 's32[2]{0}', space=sflag, size = 0x8, scoped, tag = 'scoped memory for tpu_custom_call.1']
    #allocation5 [shape = 'u8[16384]{0}', space=vmem, size = 0x4000, scoped, tag = 'input window, operand 1, single buffered']
    #allocation6 [shape = 's32[1]{0}', space=sflag, size = 0x4, scoped, tag = 'scoped memory for tpu_custom_call.1']
    #allocation7 [shape = 'u8[65536]{0}', space=vmem, size = 0x10000, scoped, tag = 'input window, operand 2, single buffered']
    #allocation8 [shape = 'u8[32768]{0}', space=vmem, size = 0x8000, scoped, tag = 'input window, operand 3, single buffered']
    #allocation9 [shape = 's32[1]{0}', space=sflag, size = 0x4, scoped, tag = 'scoped memory for tpu_custom_call.1']
    #allocation10 [shape = 'u8[32768]{0}', space=vmem, size = 0x8000, scoped, tag = 'input window, operand 4, single buffered']
    #allocation11 [shape = 'u8[4096]{0}', space=vmem, size = 0x1000, scoped, tag = 'output window, operand 0']
    %11 = vsyncpa [#allocation3], 0
    %s12 = scalar_lea.sflag [#allocation3], 1
    %13 = vsyncpa %s12, 0
    %14 = vsyncpa [#allocation6], 0
    %15 = vsyncpa [#allocation9], 0
    %16 = vsyncpa [#allocation4], 0
    %s17 = scalar_lea.sflag [#allocation4], 1
    %18 = vsyncpa %s17, 0
    loop: start=0, step=1, limit=4
    $region2: #{tpu_custom_call.1} parent=1 // loop_pre_header
      _
    $region3: #{tpu_custom_call.1} parent=1 // loop_header
      %s20 = sphi 0, %s24
      %p21 = scmp.ge.s32.totalorder %s20, 4
      %s30 = sphi 0, %s32
      %s33 = sphi 0, %s30
      %s34 = sphi 0, %s33
      %s50 = sphi 0, %s34
      %s54 = sphi 0, %s54
      %s56 = sphi 0, %s54
      %s57 = sphi 0, %s56
      %s71 = sphi 0, %s57
      %s75 = sphi 0, %s75
      %s77 = sphi 0, %s75
      %s78 = sphi 0, %s77
      %s92 = sphi 0, %s78
      %s96 = sphi 0, %s96
      %s98 = sphi 0, %s96
      %s99 = sphi 0, %s98
      %s113 = sphi 0, %s99
      %s117 = sphi 0, %s117
      %s119 = sphi 0, %s117
      %s120 = sphi 0, %s119
      %s134 = sphi 0, %s120
      %s138 = sphi 0, %s138
      %s140 = sphi 0, %s138
      %s141 = sphi 0, %s140
      %s155 = sphi 0, %s141
      %s161 = sphi 0, %s163
      %s164 = sphi 0, %s161
      %s165 = sphi 0, %s164
      %s181 = sphi 0, %s165
    $region4: #{tpu_custom_call.1} parent=1 // loop_header_branch
      %23 = sbr.rel (%p21) target = $region8
    $region5: #{tpu_custom_call.1} parent=1 // loop_body
      %s25 = ssub.s32 %s20, 1
      %s26 = ssub.s32 %s20, 2
      %s27 = sadd.s32 %s20, 1
      %s28 = ssub.s32 %s20, %s27
      %p29 = scmp.eq.s32.totalorder %s28, 0
      %s31 = sadd.s32 %s30, 1
      %s32 = scalar_select %p29, %s30, %s31
      %p35 = pneg %p29
      %p36 = scmp.eq.s32.totalorder %s20, 1
      %p37 = por %p35, %p36
      %p38 = scmp.ne.s32.totalorder %s30, %s33
      %p39 = scmp.eq.s32.totalorder %s20, 0
      %p40 = por %p38, %p39
      %p41 = scmp.ne.s32.totalorder %s30, %s33
      %p42 = scmp.eq.s32.totalorder %s25, 1
      %p43 = por %p41, %p42
      %p44 = scmp.ne.s32.totalorder %s33, %s34
      %p45 = scmp.eq.s32.totalorder %s25, 0
      %p46 = por %p44, %p45
      %p47 = scmp.ne.s32.totalorder %s33, %s34
      %p48 = scmp.eq.s32.totalorder %s26, 1
      %p49 = por %p47, %p48
      %p51 = scmp.ne.s32.totalorder %s34, %s50
      %p52 = scmp.eq.s32.totalorder %s26, 0
      %p53 = por %p51, %p52
      %s55 = sadd.s32 %s54, 1
      %p58 = scmp.eq.s32.totalorder %s20, 1
      %p59 = scmp.ne.s32.totalorder %s54, %s56
      %p60 = scmp.eq.s32.totalorder %s20, 0
      %p61 = por %p59, %p60
      %p62 = scmp.ne.s32.totalorder %s54, %s56
      %p63 = scmp.eq.s32.totalorder %s25, 1
      %p64 = por %p62, %p63
      %p65 = scmp.ne.s32.totalorder %s56, %s57
      %p66 = scmp.eq.s32.totalorder %s25, 0
      %p67 = por %p65, %p66
      %p68 = scmp.ne.s32.totalorder %s56, %s57
      %p69 = scmp.eq.s32.totalorder %s26, 1
      %p70 = por %p68, %p69
      %p72 = scmp.ne.s32.totalorder %s57, %s71
      %p73 = scmp.eq.s32.totalorder %s26, 0
      %p74 = por %p72, %p73
      %s76 = sadd.s32 %s75, 1
      %p79 = scmp.eq.s32.totalorder %s20, 1
      %p80 = scmp.ne.s32.totalorder %s75, %s77
      %p81 = scmp.eq.s32.totalorder %s20, 0
      %p82 = por %p80, %p81
      %p83 = scmp.ne.s32.totalorder %s75, %s77
      %p84 = scmp.eq.s32.totalorder %s25, 1
      %p85 = por %p83, %p84
      %p86 = scmp.ne.s32.totalorder %s77, %s78
      %p87 = scmp.eq.s32.totalorder %s25, 0
      %p88 = por %p86, %p87
      %p89 = scmp.ne.s32.totalorder %s77, %s78
      %p90 = scmp.eq.s32.totalorder %s26, 1
      %p91 = por %p89, %p90
      %p93 = scmp.ne.s32.totalorder %s78, %s92
      %p94 = scmp.eq.s32.totalorder %s26, 0
      %p95 = por %p93, %p94
      %s97 = sadd.s32 %s96, 1
      %p100 = scmp.eq.s32.totalorder %s20, 1
      %p101 = scmp.ne.s32.totalorder %s96, %s98
      %p102 = scmp.eq.s32.totalorder %s20, 0
      %p103 = por %p101, %p102
      %p104 = scmp.ne.s32.totalorder %s96, %s98
      %p105 = scmp.eq.s32.totalorder %s25, 1
      %p106 = por %p104, %p105
      %p107 = scmp.ne.s32.totalorder %s98, %s99
      %p108 = scmp.eq.s32.totalorder %s25, 0
      %p109 = por %p107, %p108
      %p110 = scmp.ne.s32.totalorder %s98, %s99
      %p111 = scmp.eq.s32.totalorder %s26, 1
      %p112 = por %p110, %p111
      %p114 = scmp.ne.s32.totalorder %s99, %s113
      %p115 = scmp.eq.s32.totalorder %s26, 0
      %p116 = por %p114, %p115
      %s118 = sadd.s32 %s117, 1
      %p121 = scmp.eq.s32.totalorder %s20, 1
      %p122 = scmp.ne.s32.totalorder %s117, %s119
      %p123 = scmp.eq.s32.totalorder %s20, 0
      %p124 = por %p122, %p123
      %p125 = scmp.ne.s32.totalorder %s117, %s119
      %p126 = scmp.eq.s32.totalorder %s25, 1
      %p127 = por %p125, %p126
      %p128 = scmp.ne.s32.totalorder %s119, %s120
      %p129 = scmp.eq.s32.totalorder %s25, 0
      %p130 = por %p128, %p129
      %p131 = scmp.ne.s32.totalorder %s119, %s120
      %p132 = scmp.eq.s32.totalorder %s26, 1
      %p133 = por %p131, %p132
      %p135 = scmp.ne.s32.totalorder %s120, %s134
      %p136 = scmp.eq.s32.totalorder %s26, 0
      %p137 = por %p135, %p136
      %s139 = sadd.s32 %s138, 1
      %p142 = scmp.eq.s32.totalorder %s20, 1
      %p143 = scmp.ne.s32.totalorder %s138, %s140
      %p144 = scmp.eq.s32.totalorder %s20, 0
      %p145 = por %p143, %p144
      %p146 = scmp.ne.s32.totalorder %s138, %s140
      %p147 = scmp.eq.s32.totalorder %s25, 1
      %p148 = por %p146, %p147
      %p149 = scmp.ne.s32.totalorder %s140, %s141
      %p150 = scmp.eq.s32.totalorder %s25, 0
      %p151 = por %p149, %p150
      %p152 = scmp.ne.s32.totalorder %s140, %s141
      %p153 = scmp.eq.s32.totalorder %s26, 1
      %p154 = por %p152, %p153
      %p156 = scmp.ne.s32.totalorder %s141, %s155
      %p157 = scmp.eq.s32.totalorder %s26, 0
      %p158 = por %p156, %p157
      %s159 = ssub.s32 %s20, %s27
      %p160 = scmp.eq.s32.totalorder %s159, 0
      %s162 = sadd.s32 %s161, 1
      %s163 = scalar_select %p160, %s161, %s162
      %p166 = pneg %p160
      %p167 = scmp.eq.s32.totalorder %s20, 1
      %p168 = por %p166, %p167
      %p169 = scmp.ne.s32.totalorder %s161, %s164
      %p170 = scmp.eq.s32.totalorder %s20, 0
      %p171 = por %p169, %p170
      %p172 = scmp.ne.s32.totalorder %s161, %s164
      %p173 = scmp.eq.s32.totalorder %s25, 1
      %p174 = por %p172, %p173
      %p175 = scmp.ne.s32.totalorder %s164, %s165
      %p176 = scmp.eq.s32.totalorder %s25, 0
      %p177 = por %p175, %p176
      %p178 = scmp.ne.s32.totalorder %s164, %s165
      %p179 = scmp.eq.s32.totalorder %s26, 1
      %p180 = por %p178, %p179
      %p182 = scmp.ne.s32.totalorder %s165, %s181
      %p183 = scmp.eq.s32.totalorder %s26, 0
      %p184 = por %p182, %p183
      %p185 = scmp.le.s32.totalorder 1, %s20
      %p186 = scmp.lt.s32.totalorder %s20, 3
      %p187 = pnand %p185, %p186
      %p188 = pneg %p187
      // Predicated region
      $region9: #{tpu_custom_call.1} parent=5 // pred_check
        _
      $region10: #{tpu_custom_call.1} parent=5 // pred_check_branch
        %190 = sbr.rel (%p187) target = $region12
      $region11: #{tpu_custom_call.1} parent=5 // pred_region
        %s191 = ssub.s32 %s20, 1
        // Predicated region
        $region13: #{tpu_custom_call.1} parent=11 // pred_check
          %p192 = pneg %p67
        $region14: #{tpu_custom_call.1} parent=11 // pred_check_branch
          %194 = sbr.rel (%p192) target = $region16
        $region15: #{tpu_custom_call.1} parent=11 // pred_region
          %s196 = ssub.s32 512, 512
          %197 = vsyncadd [#allocation6], %s196
          %s198 = sshll.u32 [#allocation5], 4
          %s199 = int_to_ptr.vmem [resolvable:$true] %s198
          %204 = dma.hbm_to_vmem [thread:$0]  %s1, 512, %s199, [#allocation6], 128, 128, 8
        $region16: #{tpu_custom_call.1} parent=11 // pred_fallthru
          _
        // Predicated region
        $region17: #{tpu_custom_call.1} parent=11 // pred_check
          %p205 = pneg %p88
        $region18: #{tpu_custom_call.1} parent=11 // pred_check_branch
          %207 = sbr.rel (%p205) target = $region20
        $region19: #{tpu_custom_call.1} parent=11 // pred_region
          %s209 = ssub.s32 2048, 2048
          %210 = vsyncadd [#allocation6], %s209
          %s211 = sshll.u32 [#allocation7], 4
          %s212 = int_to_ptr.vmem [resolvable:$true] %s211
          %217 = dma.hbm_to_vmem [thread:$0]  %s2, 2048, %s212, [#allocation6], 64, 64, 4
        $region20: #{tpu_custom_call.1} parent=11 // pred_fallthru
          _
        // Predicated region
        $region21: #{tpu_custom_call.1} parent=11 // pred_check
          %p218 = pneg %p109
        $region22: #{tpu_custom_call.1} parent=11 // pred_check_branch
          %220 = sbr.rel (%p218) target = $region24
        $region23: #{tpu_custom_call.1} parent=11 // pred_region
          %s222 = ssub.s32 1024, 1024
          %223 = vsyncadd [#allocation9], %s222
          %s224 = sshll.u32 [#allocation8], 4
          %s225 = int_to_ptr.vmem [resolvable:$true] %s224
          %230 = dma.hbm_to_vmem [thread:$0]  %s3, 1024, %s225, [#allocation9], 64, 64, 4
        $region24: #{tpu_custom_call.1} parent=11 // pred_fallthru
          _
        // Predicated region
        $region25: #{tpu_custom_call.1} parent=11 // pred_check
          %p231 = pneg %p130
        $region26: #{tpu_custom_call.1} parent=11 // pred_check_branch
          %233 = sbr.rel (%p231) target = $region28
        $region27: #{tpu_custom_call.1} parent=11 // pred_region
          %s235 = ssub.s32 1024, 1024
          %236 = vsyncadd [#allocation9], %s235
          %s237 = sshll.u32 [#allocation10], 4
          %s238 = int_to_ptr.vmem [resolvable:$true] %s237
          %243 = dma.hbm_to_vmem [thread:$0]  %s4, 1024, %s238, [#allocation9], 64, 64, 4
        $region28: #{tpu_custom_call.1} parent=11 // pred_fallthru
          _
        // Predicated region
        $region29: #{tpu_custom_call.1} parent=11 // pred_check
          %p244 = pneg %p151
        $region30: #{tpu_custom_call.1} parent=11 // pred_check_branch
          %246 = sbr.rel (%p244) target = $region32
        $region31: #{tpu_custom_call.1} parent=11 // pred_region
          _
        $region32: #{tpu_custom_call.1} parent=11 // pred_fallthru
          _
      $region12: #{tpu_custom_call.1} parent=5 // pred_fallthru
        _
      %p247 = scmp.lt.s32.totalorder %s20, 2
      // Predicated region
      $region33: #{tpu_custom_call.1} parent=5 // pred_check
        %p248 = pneg %p247
      $region34: #{tpu_custom_call.1} parent=5 // pred_check_branch
        %250 = sbr.rel (%p248) target = $region36
      $region35: #{tpu_custom_call.1} parent=5 // pred_region
        // Predicated region
        $region37: #{tpu_custom_call.1} parent=35 // pred_check
          %p251 = pneg %p40
        $region38: #{tpu_custom_call.1} parent=35 // pred_check_branch
          %253 = sbr.rel (%p251) target = $region40
        $region39: #{tpu_custom_call.1} parent=35 // pred_region
          %s254 = sand.u32 %s30, 1
          %s255 = scalar_lea.sflag [#allocation3], %s254
          %s256 = sand.u32 %s30, 1
          %s257 = smul.addr %s256, 8
          %s258 = scalar_lea.vmem [#allocation2], %s257
          %s260 = ssub.s32 128, 128
          %261 = vsyncadd %s255, %s260
          %s262 = smul.addr %s20, 128
          %s263 = scalar_lea.hbm %s0, %s262
          %s265 = sshll.u32 %s258, 4
          %s266 = int_to_ptr.vmem [resolvable:$true] %s265
          %268 = dma.hbm_to_vmem [thread:$0]  %s263, 128, %s266, %s255
        $region40: #{tpu_custom_call.1} parent=35 // pred_fallthru
          _
      $region36: #{tpu_custom_call.1} parent=5 // pred_fallthru
        _
      %p269 = scmp.le.s32.totalorder 1, %s20
      %p270 = scmp.lt.s32.totalorder %s20, 3
      %p271 = pnand %p269, %p270
      %p272 = pneg %p271
      // Predicated region
      $region41: #{tpu_custom_call.1} parent=5 // pred_check
        _
      $region42: #{tpu_custom_call.1} parent=5 // pred_check_branch
        %274 = sbr.rel (%p271) target = $region44
      $region43: #{tpu_custom_call.1} parent=5 // pred_region
        %s275 = ssub.s32 %s20, 1
        %s276 = sand.u32 %s33, 1
        %s277 = scalar_lea.sflag [#allocation3], %s276
        %s278 = sand.u32 %s33, 1
        %s279 = smul.addr %s278, 8
        %s280 = scalar_lea.vmem [#allocation2], %s279
        // Predicated region
        $region45: #{tpu_custom_call.1} parent=43 // pred_check
          %p281 = pneg %p46
        $region46: #{tpu_custom_call.1} parent=43 // pred_check_branch
          %283 = sbr.rel (%p281) target = $region48
        $region47: #{tpu_custom_call.1} parent=43 // pred_region
          %284 = dma.done %s277, 128
        $region48: #{tpu_custom_call.1} parent=43 // pred_fallthru
          _
        // Predicated region
        $region49: #{tpu_custom_call.1} parent=43 // pred_check
          %p285 = pneg %p67
        $region50: #{tpu_custom_call.1} parent=43 // pred_check_branch
          %287 = sbr.rel (%p285) target = $region52
        $region51: #{tpu_custom_call.1} parent=43 // pred_region
          %288 = dma.done [#allocation6], 512
        $region52: #{tpu_custom_call.1} parent=43 // pred_fallthru
          _
        // Predicated region
        $region53: #{tpu_custom_call.1} parent=43 // pred_check
          %p289 = pneg %p88
        $region54: #{tpu_custom_call.1} parent=43 // pred_check_branch
          %291 = sbr.rel (%p289) target = $region56
        $region55: #{tpu_custom_call.1} parent=43 // pred_region
          %292 = dma.done [#allocation6], 2048
        $region56: #{tpu_custom_call.1} parent=43 // pred_fallthru
          _
        // Predicated region
        $region57: #{tpu_custom_call.1} parent=43 // pred_check
          %p293 = pneg %p109
        $region58: #{tpu_custom_call.1} parent=43 // pred_check_branch
          %295 = sbr.rel (%p293) target = $region60
        $region59: #{tpu_custom_call.1} parent=43 // pred_region
          %296 = dma.done [#allocation9], 1024
        $region60: #{tpu_custom_call.1} parent=43 // pred_fallthru
          _
        // Predicated region
        $region61: #{tpu_custom_call.1} parent=43 // pred_check
          %p297 = pneg %p130
        $region62: #{tpu_custom_call.1} parent=43 // pred_check_branch
          %299 = sbr.rel (%p297) target = $region64
        $region63: #{tpu_custom_call.1} parent=43 // pred_region
          %300 = dma.done [#allocation9], 1024
        $region64: #{tpu_custom_call.1} parent=43 // pred_fallthru
          _
        %s301 = sand.u32 %s33, 1
        %s302 = scalar_lea.sflag [#allocation3], %s301
        %s303 = sand.u32 %s33, 1
        %s304 = smul.addr %s303, 8
        %s305 = scalar_lea.vmem [#allocation2], %s304
        %p306 = pneg %p46
        %p307 = pneg %p43
        %p308 = pneg %p67
        %p309 = pneg %p64
        %p310 = pneg %p88
        %p311 = pneg %p85
        %p312 = pneg %p109
        %p313 = pneg %p106
        %p314 = pneg %p130
        %p315 = pneg %p127
        %p316 = pneg %p151
        %p317 = pneg %p148
        %p318 = pneg %p177
        %p319 = pneg %p174
        %s320 = sand.u32 %s164, 1
        %s321 = scalar_lea.sflag [#allocation4], %s320
        %s322 = sand.u32 %s164, 1
        %s323 = smul.addr %s322, 4
        %s324 = scalar_lea.vmem [#allocation11], %s323
        %v326 = vld [vmem:[%s280] sm:$0xff]
        %v327 = vpack.c.bf16 %v326, %v326
        %v328 = vld [vmem:[%s5] ss:$4 sm:$0x3]
        %v329 = vld [vmem:[%s5 + $0x1] sm:$0x1]
        %v330 = vld [vmem:[%s5 + $0x2] sm:$0x1]
        %v331 = vld [vmem:[%s5 + $0x3] sm:$0x1]
        %v332 = vld [vmem:[#allocation5] sm:$0xff]
        %v333 = vld [vmem:[#allocation5 + $0x8] sm:$0xff]
        %v334 = vld [vmem:[#allocation5 + $0x10] sm:$0xff]
        %v335 = vld [vmem:[#allocation5 + $0x18] sm:$0xff]
        %v337 = vlaneseq
        %v338 = vshrl.u32 %v337, 7
        %v339 = vsub.s32 0, %v338
        %v340 = vrot.slane %v328, %v339
        %v341 = vlaneseq
        %v342 = vshrl.u32 %v341, 7
        %v343 = vsub.s32 1, %v342
        %v344 = vrot.slane %v328, %v343
        %v351 = vunpack.c.l.b16 %v332
        %v352 = vunpack.c.h.b16 %v332
        %v353 = vunpack.c.l.b16 %v333
        %v354 = vunpack.c.h.b16 %v333
        %v355 = vunpack.c.l.b16 %v334
        %v356 = vunpack.c.h.b16 %v334
        %v357 = vunpack.c.l.b16 %v335
        %v358 = vunpack.c.h.b16 %v335
        %v359 = vpack.c.b16 %v353, %v351
        %v360 = vpack.c.b16 %v354, %v352
        %v361 = vpack.c.b16 %v357, %v355
        %v362 = vpack.c.b16 %v358, %v356
        %vm367 = vcmask 261120
        %v369 = vsel %vm367, %v327, 0
        %371 = vmatprep.subr.bf16.mxu0 %v360
        %372 = vmatpush1.bf16.msra.mxu0 %v359
        %373 = vmatprep.subr.bf16.mxu0 %v362
        %374 = vmatpush1.bf16.msra.mxu0 %v361
        %375 = vmatprep.subr.bf16.mxu0 0
        %376 = vmatpush1.bf16.msra.mxu0 0
        %377 = vmatprep.subr.bf16.mxu0 0
        %378 = vmatpush1.bf16.msra.mxu0 0
        %379 = vmatprep.subr.bf16.mxu0 0
        %380 = vmatpush1.bf16.msra.mxu0 0
        %381 = vmatprep.subr.bf16.mxu0 0
        %382 = vmatpush1.bf16.msra.mxu0 0
        %383 = vmatprep.subr.bf16.mxu0 0
        %384 = vmatpush1.bf16.msra.mxu0 0
        %385 = vmatprep.subr.bf16.mxu0 0
        %386 = vmatpush1.bf16.msra.mxu0 0
        %387 = vmatprep.subr.bf16.mxu0 0
        %388 = vmatpush1.bf16.msra.mxu0 0
        %389 = vmatprep.subr.bf16.mxu0 0
        %390 = vmatpush1.bf16.msra.mxu0 0
        %391 = vmatprep.subr.bf16.mxu0 0
        %392 = vmatpush1.bf16.msra.mxu0 0
        %393 = vmatprep.subr.bf16.mxu0 0
        %394 = vmatpush1.bf16.msra.mxu0 0
        %395 = vmatprep.subr.bf16.mxu0 0
        %396 = vmatpush1.bf16.msra.mxu0 0
        %397 = vmatprep.subr.bf16.mxu0 0
        %398 = vmatpush1.bf16.msra.mxu0 0
        %399 = vmatprep.subr.bf16.mxu0 0
        %400 = vmatpush1.bf16.msra.mxu0 0
        %401 = vmatprep.subr.bf16.mxu0 0
        %402 = vmatpush1.bf16.msra.mxu0 0
        %403 = vmatprep.mubr.bf16.mxu0 0
        %404 = vmatmul.mubr.bf16.gmra.mrb[0].mxu0 %v369
        %v405 = vpop.f32.mrb[0].mxu0
        %v406 = vadd.f32 %v340, %v405
        %v407 = vpop.f32.mrb[0].mxu0
        %v408 = vadd.f32 %v344, %v407
        %v409 = vpop.f32.mrb[0].mxu0
        %v410 = vpop.f32.mrb[0].mxu0
        %411 = vdwg.mxu0
        %v412 = vmax.f32 %v406, 0.0
        %v413 = vmax.f32 %v408, 0.0
        %v414 = vpack.c.bf16 %v412, %v412
        %v415 = vpack.c.bf16 %v413, %v413
        %v416 = vld [vmem:[#allocation7] sm:$0xf]
        %v417 = vld [vmem:[#allocation7 + $0x4] sm:$0xf]
        %v418 = vld [vmem:[#allocation7 + $0x8] sm:$0xf]
        %v419 = vld [vmem:[#allocation7 + $0xc] sm:$0xf]
        %v420 = vld [vmem:[#allocation7 + $0x10] sm:$0xf]
        %v421 = vld [vmem:[#allocation7 + $0x14] sm:$0xf]
        %v422 = vld [vmem:[#allocation7 + $0x18] sm:$0xf]
        %v423 = vld [vmem:[#allocation7 + $0x1c] sm:$0xf]
        %v424 = vld [vmem:[#allocation7 + $0x20] sm:$0xf]
        %v425 = vld [vmem:[#allocation7 + $0x24] sm:$0xf]
        %v426 = vld [vmem:[#allocation7 + $0x28] sm:$0xf]
        %v427 = vld [vmem:[#allocation7 + $0x2c] sm:$0xf]
        %v428 = vld [vmem:[#allocation7 + $0x30] sm:$0xf]
        %v429 = vld [vmem:[#allocation7 + $0x34] sm:$0xf]
        %v430 = vld [vmem:[#allocation7 + $0x38] sm:$0xf]
        %v431 = vld [vmem:[#allocation7 + $0x3c] sm:$0xf]
        %v432 = vld [vmem:[#allocation7 + $0x40] sm:$0xf]
        %v433 = vld [vmem:[#allocation7 + $0x44] sm:$0xf]
        %v434 = vld [vmem:[#allocation7 + $0x48] sm:$0xf]
        %v435 = vld [vmem:[#allocation7 + $0x4c] sm:$0xf]
        %v436 = vld [vmem:[#allocation7 + $0x50] sm:$0xf]
        %v437 = vld [vmem:[#allocation7 + $0x54] sm:$0xf]
        %v438 = vld [vmem:[#allocation7 + $0x58] sm:$0xf]
        %v439 = vld [vmem:[#allocation7 + $0x5c] sm:$0xf]
        %v440 = vld [vmem:[#allocation7 + $0x60] sm:$0xf]
        %v441 = vld [vmem:[#allocation7 + $0x64] sm:$0xf]
        %v442 = vld [vmem:[#allocation7 + $0x68] sm:$0xf]
        %v443 = vld [vmem:[#allocation7 + $0x6c] sm:$0xf]
        %v444 = vld [vmem:[#allocation7 + $0x70] sm:$0xf]
        %v445 = vld [vmem:[#allocation7 + $0x74] sm:$0xf]
        %v446 = vld [vmem:[#allocation7 + $0x78] sm:$0xf]
        %v447 = vld [vmem:[#allocation7 + $0x7c] sm:$0xf]
        %v448 = vlaneseq
        %v449 = vshrl.u32 %v448, 7
        %v450 = vsub.s32 0, %v449
        %v451 = vrot.slane %v329, %v450
        %v484 = vunpack.c.l.b16 %v416
        %v485 = vunpack.c.l.b16 %v417
        %v486 = vunpack.c.l.b16 %v418
        %v487 = vunpack.c.l.b16 %v419
        %v488 = vunpack.c.l.b16 %v420
        %v489 = vunpack.c.l.b16 %v421
        %v490 = vunpack.c.l.b16 %v422
        %v491 = vunpack.c.l.b16 %v423
        %v492 = vunpack.c.l.b16 %v424
        %v493 = vunpack.c.l.b16 %v425
        %v494 = vunpack.c.l.b16 %v426
        %v495 = vunpack.c.l.b16 %v427
        %v496 = vunpack.c.l.b16 %v428
        %v497 = vunpack.c.l.b16 %v429
        %v498 = vunpack.c.l.b16 %v430
        %v499 = vunpack.c.l.b16 %v431
        %v500 = vunpack.c.l.b16 %v432
        %v501 = vunpack.c.l.b16 %v433
        %v502 = vunpack.c.l.b16 %v434
        %v503 = vunpack.c.l.b16 %v435
        %v504 = vunpack.c.l.b16 %v436
        %v505 = vunpack.c.l.b16 %v437
        %v506 = vunpack.c.l.b16 %v438
        %v507 = vunpack.c.l.b16 %v439
        %v508 = vunpack.c.l.b16 %v440
        %v509 = vunpack.c.l.b16 %v441
        %v510 = vunpack.c.l.b16 %v442
        %v511 = vunpack.c.l.b16 %v443
        %v512 = vunpack.c.l.b16 %v444
        %v513 = vunpack.c.l.b16 %v445
        %v514 = vunpack.c.l.b16 %v446
        %v515 = vunpack.c.l.b16 %v447
        %v516 = vpack.c.b16 %v485, %v484
        %v517 = vpack.c.b16 %v487, %v486
        %v518 = vpack.c.b16 %v489, %v488
        %v519 = vpack.c.b16 %v491, %v490
        %v520 = vpack.c.b16 %v493, %v492
        %v521 = vpack.c.b16 %v495, %v494
        %v522 = vpack.c.b16 %v497, %v496
        %v523 = vpack.c.b16 %v499, %v498
        %v524 = vpack.c.b16 %v501, %v500
        %v525 = vpack.c.b16 %v503, %v502
        %v526 = vpack.c.b16 %v505, %v504
        %v527 = vpack.c.b16 %v507, %v506
        %v528 = vpack.c.b16 %v509, %v508
        %v529 = vpack.c.b16 %v511, %v510
        %v530 = vpack.c.b16 %v513, %v512
        %v531 = vpack.c.b16 %v515, %v514
        %548 = vmatprep.subr.bf16.mxu0 0
        %549 = vmatpush1.bf16.msra.mxu0 %v516
        %550 = vmatprep.subr.bf16.mxu0 0
        %551 = vmatpush1.bf16.msra.mxu0 %v517
        %552 = vmatprep.subr.bf16.mxu0 0
        %553 = vmatpush1.bf16.msra.mxu0 %v518
        %554 = vmatprep.subr.bf16.mxu0 0
        %555 = vmatpush1.bf16.msra.mxu0 %v519
        %556 = vmatprep.subr.bf16.mxu0 0
        %557 = vmatpush1.bf16.msra.mxu0 %v520
        %558 = vmatprep.subr.bf16.mxu0 0
        %559 = vmatpush1.bf16.msra.mxu0 %v521
        %560 = vmatprep.subr.bf16.mxu0 0
        %561 = vmatpush1.bf16.msra.mxu0 %v522
        %562 = vmatprep.subr.bf16.mxu0 0
        %563 = vmatpush1.bf16.msra.mxu0 %v523
        %564 = vmatprep.subr.bf16.mxu0 0
        %565 = vmatpush1.bf16.msra.mxu0 %v524
        %566 = vmatprep.subr.bf16.mxu0 0
        %567 = vmatpush1.bf16.msra.mxu0 %v525
        %568 = vmatprep.subr.bf16.mxu0 0
        %569 = vmatpush1.bf16.msra.mxu0 %v526
        %570 = vmatprep.subr.bf16.mxu0 0
        %571 = vmatpush1.bf16.msra.mxu0 %v527
        %572 = vmatprep.subr.bf16.mxu0 0
        %573 = vmatpush1.bf16.msra.mxu0 %v528
        %574 = vmatprep.subr.bf16.mxu0 0
        %575 = vmatpush1.bf16.msra.mxu0 %v529
        %576 = vmatprep.subr.bf16.mxu0 0
        %577 = vmatpush1.bf16.msra.mxu0 %v530
        %578 = vmatprep.subr.bf16.mxu0 0
        %579 = vmatpush1.bf16.msra.mxu0 %v531
        %580 = vmatprep.mubr.bf16.mxu0 %v415
        %581 = vmatmul.mubr.bf16.gmra.mrb[0].mxu0 %v414
        %v582 = vpop.f32.mrb[0].mxu0
        %v583 = vadd.f32 %v451, %v582
        %v584 = vpop.f32.mrb[0].mxu0
        %v585 = vpop.f32.mrb[0].mxu0
        %v586 = vpop.f32.mrb[0].mxu0
        %587 = vdwg.mxu0
        %v588 = vmax.f32 %v583, 0.0
        %v589 = vpack.c.bf16 %v588, %v588
        %v590 = vld [vmem:[#allocation8] sm:$0xf]
        %v591 = vld [vmem:[#allocation8 + $0x4] sm:$0xf]
        %v592 = vld [vmem:[#allocation8 + $0x8] sm:$0xf]
        %v593 = vld [vmem:[#allocation8 + $0xc] sm:$0xf]
        %v594 = vld [vmem:[#allocation8 + $0x10] sm:$0xf]
        %v595 = vld [vmem:[#allocation8 + $0x14] sm:$0xf]
        %v596 = vld [vmem:[#allocation8 + $0x18] sm:$0xf]
        %v597 = vld [vmem:[#allocation8 + $0x1c] sm:$0xf]
        %v598 = vld [vmem:[#allocation8 + $0x20] sm:$0xf]
        %v599 = vld [vmem:[#allocation8 + $0x24] sm:$0xf]
        %v600 = vld [vmem:[#allocation8 + $0x28] sm:$0xf]
        %v601 = vld [vmem:[#allocation8 + $0x2c] sm:$0xf]
        %v602 = vld [vmem:[#allocation8 + $0x30] sm:$0xf]
        %v603 = vld [vmem:[#allocation8 + $0x34] sm:$0xf]
        %v604 = vld [vmem:[#allocation8 + $0x38] sm:$0xf]
        %v605 = vld [vmem:[#allocation8 + $0x3c] sm:$0xf]
        %v606 = vlaneseq
        %v607 = vshrl.u32 %v606, 7
        %v608 = vsub.s32 0, %v607
        %v609 = vrot.slane %v330, %v608
        %v626 = vunpack.c.l.b16 %v590
        %v627 = vunpack.c.l.b16 %v591
        %v628 = vunpack.c.l.b16 %v592
        %v629 = vunpack.c.l.b16 %v593
        %v630 = vunpack.c.l.b16 %v594
        %v631 = vunpack.c.l.b16 %v595
        %v632 = vunpack.c.l.b16 %v596
        %v633 = vunpack.c.l.b16 %v597
        %v634 = vunpack.c.l.b16 %v598
        %v635 = vunpack.c.l.b16 %v599
        %v636 = vunpack.c.l.b16 %v600
        %v637 = vunpack.c.l.b16 %v601
        %v638 = vunpack.c.l.b16 %v602
        %v639 = vunpack.c.l.b16 %v603
        %v640 = vunpack.c.l.b16 %v604
        %v641 = vunpack.c.l.b16 %v605
        %v642 = vpack.c.b16 %v627, %v626
        %v643 = vpack.c.b16 %v629, %v628
        %v644 = vpack.c.b16 %v631, %v630
        %v645 = vpack.c.b16 %v633, %v632
        %v646 = vpack.c.b16 %v635, %v634
        %v647 = vpack.c.b16 %v637, %v636
        %v648 = vpack.c.b16 %v639, %v638
        %v649 = vpack.c.b16 %v641, %v640
        %658 = vmatprep.subr.bf16.mxu0 0
        %659 = vmatpush1.bf16.msra.mxu0 %v642
        %660 = vmatprep.subr.bf16.mxu0 0
        %661 = vmatpush1.bf16.msra.mxu0 %v643
        %662 = vmatprep.subr.bf16.mxu0 0
        %663 = vmatpush1.bf16.msra.mxu0 %v644
        %664 = vmatprep.subr.bf16.mxu0 0
        %665 = vmatpush1.bf16.msra.mxu0 %v645
        %666 = vmatprep.subr.bf16.mxu0 0
        %667 = vmatpush1.bf16.msra.mxu0 %v646
        %668 = vmatprep.subr.bf16.mxu0 0
        %669 = vmatpush1.bf16.msra.mxu0 %v647
        %670 = vmatprep.subr.bf16.mxu0 0
        %671 = vmatpush1.bf16.msra.mxu0 %v648
        %672 = vmatprep.subr.bf16.mxu0 0
        %673 = vmatpush1.bf16.msra.mxu0 %v649
        %674 = vmatprep.subr.bf16.mxu0 0
        %675 = vmatpush1.bf16.msra.mxu0 0
        %676 = vmatprep.subr.bf16.mxu0 0
        %677 = vmatpush1.bf16.msra.mxu0 0
        %678 = vmatprep.subr.bf16.mxu0 0
        %679 = vmatpush1.bf16.msra.mxu0 0
        %680 = vmatprep.subr.bf16.mxu0 0
        %681 = vmatpush1.bf16.msra.mxu0 0
        %682 = vmatprep.subr.bf16.mxu0 0
        %683 = vmatpush1.bf16.msra.mxu0 0
        %684 = vmatprep.subr.bf16.mxu0 0
        %685 = vmatpush1.bf16.msra.mxu0 0
        %686 = vmatprep.subr.bf16.mxu0 0
        %687 = vmatpush1.bf16.msra.mxu0 0
        %688 = vmatprep.subr.bf16.mxu0 0
        %689 = vmatpush1.bf16.msra.mxu0 0
        %690 = vmatprep.mubr.bf16.mxu0 0
        %691 = vmatmul.mubr.bf16.gmra.mrb[0].mxu0 %v589
        %v692 = vpop.f32.mrb[0].mxu0
        %v693 = vadd.f32 %v609, %v692
        %v694 = vpop.f32.mrb[0].mxu0
        %v695 = vpop.f32.mrb[0].mxu0
        %v696 = vpop.f32.mrb[0].mxu0
        %697 = vdwg.mxu0
        %v698 = vmax.f32 %v693, 0.0
        %v699 = vpack.c.bf16 %v698, %v698
        %v700 = vld [vmem:[#allocation10] sm:$0xf]
        %v701 = vld [vmem:[#allocation10 + $0x4] sm:$0xf]
        %v702 = vld [vmem:[#allocation10 + $0x8] sm:$0xf]
        %v703 = vld [vmem:[#allocation10 + $0xc] sm:$0xf]
        %v704 = vld [vmem:[#allocation10 + $0x10] sm:$0xf]
        %v705 = vld [vmem:[#allocation10 + $0x14] sm:$0xf]
        %v706 = vld [vmem:[#allocation10 + $0x18] sm:$0xf]
        %v707 = vld [vmem:[#allocation10 + $0x1c] sm:$0xf]
        %v708 = vld [vmem:[#allocation10 + $0x20] sm:$0xf]
        %v709 = vld [vmem:[#allocation10 + $0x24] sm:$0xf]
        %v710 = vld [vmem:[#allocation10 + $0x28] sm:$0xf]
        %v711 = vld [vmem:[#allocation10 + $0x2c] sm:$0xf]
        %v712 = vld [vmem:[#allocation10 + $0x30] sm:$0xf]
        %v713 = vld [vmem:[#allocation10 + $0x34] sm:$0xf]
        %v714 = vld [vmem:[#allocation10 + $0x38] sm:$0xf]
        %v715 = vld [vmem:[#allocation10 + $0x3c] sm:$0xf]
        %v716 = vlaneseq
        %v717 = vshrl.u32 %v716, 7
        %v718 = vsub.s32 0, %v717
        %v719 = vrot.slane %v331, %v718
        %v736 = vunpack.c.l.b16 %v700
        %v737 = vunpack.c.l.b16 %v701
        %v738 = vunpack.c.l.b16 %v702
        %v739 = vunpack.c.l.b16 %v703
        %v740 = vunpack.c.l.b16 %v704
        %v741 = vunpack.c.l.b16 %v705
        %v742 = vunpack.c.l.b16 %v706
        %v743 = vunpack.c.l.b16 %v707
        %v744 = vunpack.c.l.b16 %v708
        %v745 = vunpack.c.l.b16 %v709
        %v746 = vunpack.c.l.b16 %v710
        %v747 = vunpack.c.l.b16 %v711
        %v748 = vunpack.c.l.b16 %v712
        %v749 = vunpack.c.l.b16 %v713
        %v750 = vunpack.c.l.b16 %v714
        %v751 = vunpack.c.l.b16 %v715
        %v752 = vpack.c.b16 %v737, %v736
        %v753 = vpack.c.b16 %v739, %v738
        %v754 = vpack.c.b16 %v741, %v740
        %v755 = vpack.c.b16 %v743, %v742
        %v756 = vpack.c.b16 %v745, %v744
        %v757 = vpack.c.b16 %v747, %v746
        %v758 = vpack.c.b16 %v749, %v748
        %v759 = vpack.c.b16 %v751, %v750
        %768 = vmatprep.subr.bf16.mxu0 0
        %769 = vmatpush1.bf16.msra.mxu0 %v752
        %770 = vmatprep.subr.bf16.mxu0 0
        %771 = vmatpush1.bf16.msra.mxu0 %v753
        %772 = vmatprep.subr.bf16.mxu0 0
        %773 = vmatpush1.bf16.msra.mxu0 %v754
        %774 = vmatprep.subr.bf16.mxu0 0
        %775 = vmatpush1.bf16.msra.mxu0 %v755
        %776 = vmatprep.subr.bf16.mxu0 0
        %777 = vmatpush1.bf16.msra.mxu0 %v756
        %778 = vmatprep.subr.bf16.mxu0 0
        %779 = vmatpush1.bf16.msra.mxu0 %v757
        %780 = vmatprep.subr.bf16.mxu0 0
        %781 = vmatpush1.bf16.msra.mxu0 %v758
        %782 = vmatprep.subr.bf16.mxu0 0
        %783 = vmatpush1.bf16.msra.mxu0 %v759
        %784 = vmatprep.subr.bf16.mxu0 0
        %785 = vmatpush1.bf16.msra.mxu0 0
        %786 = vmatprep.subr.bf16.mxu0 0
        %787 = vmatpush1.bf16.msra.mxu0 0
        %788 = vmatprep.subr.bf16.mxu0 0
        %789 = vmatpush1.bf16.msra.mxu0 0
        %790 = vmatprep.subr.bf16.mxu0 0
        %791 = vmatpush1.bf16.msra.mxu0 0
        %792 = vmatprep.subr.bf16.mxu0 0
        %793 = vmatpush1.bf16.msra.mxu0 0
        %794 = vmatprep.subr.bf16.mxu0 0
        %795 = vmatpush1.bf16.msra.mxu0 0
        %796 = vmatprep.subr.bf16.mxu0 0
        %797 = vmatpush1.bf16.msra.mxu0 0
        %798 = vmatprep.subr.bf16.mxu0 0
        %799 = vmatpush1.bf16.msra.mxu0 0
        %800 = vmatprep.mubr.bf16.mxu0 0
        %801 = vmatmul.mubr.bf16.gmra.mrb[0].mxu0 %v699
        %v802 = vpop.f32.mrb[0].mxu0
        %v803 = vadd.f32 %v719, %v802
        %v804 = vpop.f32.mrb[0].mxu0
        %v805 = vpop.f32.mrb[0].mxu0
        %v806 = vpop.f32.mrb[0].mxu0
        %807 = vdwg.mxu0
        %808 = vmax.xlane.f32.xlu0 %v803
        %v809 = vpop.xlane.xlu0 %808
        %v810 = vsub.f32 %v803, %v809
        %v811 = vmul.f32 %v810, 1.442695
        %v812 = vpow.pop %v811
        %813 = vadd.xlane.f32.xlu0 %v812
        %v814 = vpop.xlane.xlu0 %813
        %v815 = vrcp.pop %v814
        %v816 = vmul.f32 %v812, %v815
        %v817 = vpack.c.bf16 %v816, %v816
        %818 = vst [vmem:[%s324] sm:$0xf] %v817
        %s819 = sand.u32 %s164, 1
        %s820 = scalar_lea.sflag [#allocation4], %s819
        %s821 = sand.u32 %s164, 1
        %s822 = smul.addr %s821, 4
        %s823 = scalar_lea.vmem [#allocation11], %s822
        // Predicated region
        $region65: #{tpu_custom_call.1} parent=43 // pred_check
          %p824 = pneg %p174
        $region66: #{tpu_custom_call.1} parent=43 // pred_check_branch
          %826 = sbr.rel (%p824) target = $region68
        $region67: #{tpu_custom_call.1} parent=43 // pred_region
          %s828 = ssub.s32 64, 64
          %829 = vsyncadd %s820, %s828
          %s830 = smul.addr %s25, 64
          %s831 = scalar_lea.hbm %s6, %s830
          %s833 = sshll.u32 %s823, 4
          %s834 = int_to_ptr.vmem [resolvable:$true] %s833
          %836 = dma.vmem_to_hbm [thread:$0]  %s834, 64, %s831, %s820
        $region68: #{tpu_custom_call.1} parent=43 // pred_fallthru
          _
      $region44: #{tpu_custom_call.1} parent=5 // pred_fallthru
        _
      %p837 = scmp.le.s32.totalorder 2, %s20
      // Predicated region
      $region69: #{tpu_custom_call.1} parent=5 // pred_check
        %p838 = pneg %p837
      $region70: #{tpu_custom_call.1} parent=5 // pred_check_branch
        %840 = sbr.rel (%p838) target = $region72
      $region71: #{tpu_custom_call.1} parent=5 // pred_region
        %s841 = ssub.s32 %s20, 2
        // Predicated region
        $region73: #{tpu_custom_call.1} parent=71 // pred_check
          %p842 = pneg %p180
        $region74: #{tpu_custom_call.1} parent=71 // pred_check_branch
          %844 = sbr.rel (%p842) target = $region76
        $region75: #{tpu_custom_call.1} parent=71 // pred_region
          %s845 = sand.u32 %s165, 1
          %s846 = scalar_lea.sflag [#allocation4], %s845
          %s847 = sand.u32 %s165, 1
          %s848 = smul.addr %s847, 4
          %s849 = scalar_lea.vmem [#allocation11], %s848
          %850 = dma.done %s846, 64
        $region76: #{tpu_custom_call.1} parent=71 // pred_fallthru
          _
      $region72: #{tpu_custom_call.1} parent=5 // pred_fallthru
        _
    $region6: #{tpu_custom_call.1} parent=1 // loop_footer
      %s24 = sadd.s32 1, %s20
    $region7: #{tpu_custom_call.1} parent=1 // loop_footer_branch
      %19 = sbr.rel target = $region3
    $region8: #{tpu_custom_call.1} parent=1 // loop_exit
      _
    %851 = vsyncpa [#allocation3], 1
    %s852 = scalar_lea.sflag [#allocation3], 1
    %853 = vsyncpa %s852, 1
    %854 = vsyncpa [#allocation6], 1
    %855 = vsyncpa [#allocation9], 1
    %856 = vsyncpa [#allocation4], 1
    %s857 = scalar_lea.sflag [#allocation4], 1
    %858 = vsyncpa %s857, 1

</llo_original>
